<compile_context>
chip_gen: v7x
topology: tpu7x:2x2x1
jax: 0.10.0
libtpu: 0.0.40
codegen_flags: <defaults>
</compile_context>

<pallas_src>
from functools import partial

import jax
import jax.numpy as jnp
import numpy as np
from jax.experimental import pallas as pl
from jax.experimental.pallas import tpu as pltpu

# ----- hyper-parameters implied by the module -----
P = 16          # para['P']
P_KNOWN = 4     # para['P_KNOWN']
DIM = 32        # hidden width

KNOWN_MASK = np.array([x < P_KNOWN for x in range(P)])
UNKNOWN_MASK = np.array([not x for x in KNOWN_MASK])
SEED_DIM = int(np.sum(UNKNOWN_MASK))            # P - P_KNOWN = 12
IN_DIM = SEED_DIM + int(np.sum(KNOWN_MASK))     # = P = 16
OUT_DIM = P - int(np.sum(KNOWN_MASK))           # = 12
OUT_PAD = 16                                    # 12 real + 4 zero-padded cols

LEAKY_SLOPE = 0.1  # matches nn.LeakyReLU(0.1, True)

_SPLIT_THRESHOLD = 256   # batches >= this get at least 2 tiles (v7x megacore)


def _round_up(x, m):
    return ((x + m - 1) // m) * m


def _cdiv(a, b):
    return -(-a // b)


def _leaky_relu(x, slope=LEAKY_SLOPE):
    return jnp.where(x > 0, x, slope * x)


def _choose_tiling(B, tb):
    """Pick (TB, B_pad, n_tiles): even split of B, TB a multiple of 16."""
    n_tiles = max(1, _cdiv(B, tb))
    if n_tiles == 1 and B >= _SPLIT_THRESHOLD:
        n_tiles = 2                       # keep both v7x TensorCores busy
    TB = _round_up(_cdiv(B, n_tiles), 16)  # multiple of 16 (bf16 sublane pairs)
    return TB, TB * n_tiles, n_tiles


def generator_kernel(x_ref,
                     w1_ref, b1_ref,
                     w2_ref, b2_ref,
                     w3_ref, b3_ref,
                     w4_ref, b4_ref,
                     out_ref):
    """Fused 4-layer MLP on one (TB, IN_DIM) batch tile.

    x is f32 in VMEM and cast to bf16 in-register; weights are bf16
    (in, out); biases are f32 (1, out).  Accumulation is f32 via
    preferred_element_type; LeakyReLU runs in f32 (v5e VPU has no bf16 ALU)
    before casting back to bf16 for the next MXU matmul.
    """
    x = x_ref[...].astype(jnp.bfloat16)                              # (TB, 16)

    h = jnp.dot(x, w1_ref[...], preferred_element_type=jnp.float32) + b1_ref[...]
    h = _leaky_relu(h).astype(jnp.bfloat16)

    h = jnp.dot(h, w2_ref[...], preferred_element_type=jnp.float32) + b2_ref[...]
    h = _leaky_relu(h).astype(jnp.bfloat16)

    h = jnp.dot(h, w3_ref[...], preferred_element_type=jnp.float32) + b3_ref[...]
    h = _leaky_relu(h).astype(jnp.bfloat16)

    out = jnp.dot(h, w4_ref[...], preferred_element_type=jnp.float32) + b4_ref[...]
    out_ref[...] = out.astype(out_ref.dtype)                         # (TB, 16) f32


def prepare_params(params):
    """One-time prep: cast weights to bf16, keep biases f32, pad layer 4
    from OUT_DIM=12 to OUT_PAD=16 output columns.  Call ONCE per parameter
    update, not per forward."""
    w1, b1, w2, b2, w3, b3, w4, b4 = params
    w4p = jnp.zeros((DIM, OUT_PAD), jnp.float32).at[:, :OUT_DIM].set(
        w4.reshape(DIM, OUT_DIM))
    b4p = jnp.zeros((1, OUT_PAD), jnp.float32).at[:, :OUT_DIM].set(
        b4.reshape(1, OUT_DIM))
    return (w1.astype(jnp.bfloat16), b1.reshape(1, DIM).astype(jnp.float32),
            w2.astype(jnp.bfloat16), b2.reshape(1, DIM).astype(jnp.float32),
            w3.astype(jnp.bfloat16), b3.reshape(1, DIM).astype(jnp.float32),
            w4p.astype(jnp.bfloat16), b4p)


@partial(jax.jit, static_argnames=("tb",))
def generator_forward(noise, prepared_params, *, tb=8192):
    """noise: (B, IN_DIM) f32; prepared_params: output of prepare_params."""
    B = noise.shape[0]
    TB, B_pad, n_tiles = _choose_tiling(B, tb)

    x = noise.astype(jnp.float32)
    if B_pad != B:
        x = jnp.pad(x, ((0, B_pad - B), (0, 0)))

    w1, b1, w2, b2, w3, b3, w4, b4 = prepared_params

    flops = 2 * B_pad * (IN_DIM * DIM + DIM * DIM + DIM * DIM + DIM * OUT_PAD)
    bytes_accessed = (B_pad * IN_DIM * 4                 # input read (f32)
                      + B_pad * OUT_PAD * 4              # output write (f32)
                      + (IN_DIM * DIM + 2 * DIM * DIM + DIM * OUT_PAD) * 2  # bf16 weights
                      + (3 * DIM + OUT_PAD) * 4)         # f32 biases

    in_specs = [
        pl.BlockSpec((TB, IN_DIM), lambda i: (i, 0)),        # noise: tiled over batch
        pl.BlockSpec((IN_DIM, DIM), lambda i: (0, 0)),       # w1  (constant index map:
        pl.BlockSpec((1, DIM), lambda i: (0, 0)),            # b1   weights/biases stay
        pl.BlockSpec((DIM, DIM), lambda i: (0, 0)),          # w2   resident, no re-DMA)
        pl.BlockSpec((1, DIM), lambda i: (0, 0)),            # b2
        pl.BlockSpec((DIM, DIM), lambda i: (0, 0)),          # w3
        pl.BlockSpec((1, DIM), lambda i: (0, 0)),            # b3
        pl.BlockSpec((DIM, OUT_PAD), lambda i: (0, 0)),      # w4 (padded to 16 cols)
        pl.BlockSpec((1, OUT_PAD), lambda i: (0, 0)),        # b4 (padded to 16 cols)
    ]
    out_specs = pl.BlockSpec((TB, OUT_PAD), lambda i: (i, 0))

    out_padded = pl.pallas_call(
        generator_kernel,
        out_shape=jax.ShapeDtypeStruct((B_pad, OUT_PAD), jnp.float32),
        grid=(n_tiles,),
        in_specs=in_specs,
        out_specs=out_specs,
        compiler_params=pltpu.CompilerParams(
            dimension_semantics=("parallel",),   # shard batch tiles across TCs (v7x)
        ),
        cost_estimate=pl.CostEstimate(
            flops=flops, transcendentals=0, bytes_accessed=bytes_accessed),
    )(x, w1, b1, w2, b2, w3, b3, w4, b4)

    return out_padded[:B, :OUT_DIM]


def init_params(key):
    """Deterministic synthetic init (shapes match the nn.Linear layers)."""
    dims = [(IN_DIM, DIM), (DIM, DIM), (DIM, DIM), (DIM, OUT_DIM)]
    params = []
    for (d_in, d_out) in dims:
        kw, kb, key = jax.random.split(key, 3)
        bound = 1.0 / np.sqrt(d_in)
        # stored as (in, out), i.e. pre-transposed vs torch's (out, in)
        w = jax.random.uniform(kw, (d_in, d_out), jnp.float32, -bound, bound)
        b = jax.random.uniform(kb, (1, d_out), jnp.float32, -bound, bound)
        params += [w, b]
    return tuple(params)


def reference_forward(noise, params):
    """Pure-JAX reference using the same bf16-operand / f32-accumulate recipe."""
    w1, b1, w2, b2, w3, b3, w4, b4 = params
    bf = jnp.bfloat16
    h = noise.astype(bf)
    h = _leaky_relu(jnp.dot(h, w1.astype(bf), preferred_element_type=jnp.float32) + b1)
    h = _leaky_relu(jnp.dot(h.astype(bf), w2.astype(bf),
                            preferred_element_type=jnp.float32) + b2)
    h = _leaky_relu(jnp.dot(h.astype(bf), w3.astype(bf),
                            preferred_element_type=jnp.float32) + b3)
    return jnp.dot(h.astype(bf), w4.astype(bf),
                   preferred_element_type=jnp.float32) + b4


if __name__ == "__main__":
    key = jax.random.PRNGKey(0)
    k_noise, k_params = jax.random.split(key)

    B = 100
    noise = jax.random.normal(k_noise, (B, IN_DIM), jnp.float32)
    params = init_params(k_params)
    prepared = prepare_params(params)   # one-time prep, outside the forward path

    ref = np.asarray(reference_forward(noise, params))

    # Multi-tile / ragged path: tb=32 -> grid=(4,), TB=32, B_pad=128.
    out_small = jax.block_until_ready(generator_forward(noise, prepared, tb=32))
    assert out_small.shape == (B, OUT_DIM), out_small.shape
    np.testing.assert_allclose(np.asarray(out_small), ref, rtol=5e-3, atol=5e-3)

    # Default large-tile path: tb=8192 -> single tile for this small batch.
    out_big = jax.block_until_ready(generator_forward(noise, prepared))
    assert out_big.shape == (B, OUT_DIM), out_big.shape
    np.testing.assert_allclose(np.asarray(out_big), ref, rtol=5e-3, atol=5e-3)

    print("KERNEL_OK")
</pallas_src>

<mosaic_0001>
module attributes {stable_mosaic.version = 11 : i64} {
  func.func @generator_kernel(%arg0: i32, %arg1: memref<32x16xf32, #tpu.memory_space<vmem>>, %arg2: memref<16x32xbf16, #tpu.memory_space<vmem>>, %arg3: memref<1x32xf32, #tpu.memory_space<vmem>>, %arg4: memref<32x32xbf16, #tpu.memory_space<vmem>>, %arg5: memref<1x32xf32, #tpu.memory_space<vmem>>, %arg6: memref<32x32xbf16, #tpu.memory_space<vmem>>, %arg7: memref<1x32xf32, #tpu.memory_space<vmem>>, %arg8: memref<32x16xbf16, #tpu.memory_space<vmem>>, %arg9: memref<1x16xf32, #tpu.memory_space<vmem>>, %arg10: memref<32x16xf32, #tpu.memory_space<vmem>>) attributes {dimension_semantics = [#tpu.dimension_semantics<parallel>], iteration_bounds = array<i64: 4>, scalar_prefetch = 0 : i64, scratch_operands = 0 : i64, tpu.core_type = #tpu.core_type<tc>, window_params = [{transform_indices = @transform_0, window_bounds = array<i64: 32, 16>}, {pipeline_mode = #tpu.pipeline_mode<synchronous>, transform_indices = @transform_1, window_bounds = array<i64: 16, 32>}, {pipeline_mode = #tpu.pipeline_mode<synchronous>, transform_indices = @transform_2, window_bounds = array<i64: 1, 32>}, {pipeline_mode = #tpu.pipeline_mode<synchronous>, transform_indices = @transform_3, window_bounds = array<i64: 32, 32>}, {pipeline_mode = #tpu.pipeline_mode<synchronous>, transform_indices = @transform_4, window_bounds = array<i64: 1, 32>}, {pipeline_mode = #tpu.pipeline_mode<synchronous>, transform_indices = @transform_5, window_bounds = array<i64: 32, 32>}, {pipeline_mode = #tpu.pipeline_mode<synchronous>, transform_indices = @transform_6, window_bounds = array<i64: 1, 32>}, {pipeline_mode = #tpu.pipeline_mode<synchronous>, transform_indices = @transform_7, window_bounds = array<i64: 32, 16>}, {pipeline_mode = #tpu.pipeline_mode<synchronous>, transform_indices = @transform_8, window_bounds = array<i64: 1, 16>}, {transform_indices = @transform_9, window_bounds = array<i64: 32, 16>}]} {
    %c0 = arith.constant 0 : index
    %c0_0 = arith.constant 0 : index
    %0 = vector.load %arg1[%c0, %c0_0] : memref<32x16xf32, #tpu.memory_space<vmem>>, vector<32x16xf32>
    %1 = arith.truncf %0 : vector<32x16xf32> to vector<32x16xbf16>
    %c0_1 = arith.constant 0 : index
    %c0_2 = arith.constant 0 : index
    %2 = vector.load %arg2[%c0_1, %c0_2] : memref<16x32xbf16, #tpu.memory_space<vmem>>, vector<16x32xbf16>
    %cst = arith.constant dense<0.000000e+00> : vector<32x32xf32>
    %3 = tpu.matmul %1, %2, %cst {dimension_numbers = #tpu.dot_dimension_numbers<[1], [0], [0], [1], [0, 0, 1, 1], [], []>} : vector<32x16xbf16>, vector<16x32xbf16>, vector<32x32xf32> -> vector<32x32xf32>
    %c0_3 = arith.constant 0 : index
    %c0_4 = arith.constant 0 : index
    %4 = vector.load %arg3[%c0_3, %c0_4] : memref<1x32xf32, #tpu.memory_space<vmem>>, vector<1x32xf32>
    %5 = vector.broadcast %4 : vector<1x32xf32> to vector<32x32xf32>
    %6 = arith.addf %3, %5 : vector<32x32xf32>
    %cst_5 = arith.constant 0.000000e+00 : f32
    %7 = vector.broadcast %cst_5 : f32 to vector<32x32xf32>
    %8 = arith.cmpf ogt, %6, %7 : vector<32x32xf32>
    %cst_6 = arith.constant 1.000000e-01 : f32
    %9 = vector.broadcast %cst_6 : f32 to vector<32x32xf32>
    %10 = arith.mulf %9, %6 : vector<32x32xf32>
    %11 = arith.select %8, %6, %10 : vector<32x32xi1>, vector<32x32xf32>
    %12 = arith.truncf %11 : vector<32x32xf32> to vector<32x32xbf16>
    %c0_7 = arith.constant 0 : index
    %c0_8 = arith.constant 0 : index
    %13 = vector.load %arg4[%c0_7, %c0_8] : memref<32x32xbf16, #tpu.memory_space<vmem>>, vector<32x32xbf16>
    %cst_9 = arith.constant dense<0.000000e+00> : vector<32x32xf32>
    %14 = tpu.matmul %12, %13, %cst_9 {dimension_numbers = #tpu.dot_dimension_numbers<[1], [0], [0], [1], [0, 0, 1, 1], [], []>} : vector<32x32xbf16>, vector<32x32xbf16>, vector<32x32xf32> -> vector<32x32xf32>
    %c0_10 = arith.constant 0 : index
    %c0_11 = arith.constant 0 : index
    %15 = vector.load %arg5[%c0_10, %c0_11] : memref<1x32xf32, #tpu.memory_space<vmem>>, vector<1x32xf32>
    %16 = vector.broadcast %15 : vector<1x32xf32> to vector<32x32xf32>
    %17 = arith.addf %14, %16 : vector<32x32xf32>
    %cst_12 = arith.constant 0.000000e+00 : f32
    %18 = vector.broadcast %cst_12 : f32 to vector<32x32xf32>
    %19 = arith.cmpf ogt, %17, %18 : vector<32x32xf32>
    %cst_13 = arith.constant 1.000000e-01 : f32
    %20 = vector.broadcast %cst_13 : f32 to vector<32x32xf32>
    %21 = arith.mulf %20, %17 : vector<32x32xf32>
    %22 = arith.select %19, %17, %21 : vector<32x32xi1>, vector<32x32xf32>
    %23 = arith.truncf %22 : vector<32x32xf32> to vector<32x32xbf16>
    %c0_14 = arith.constant 0 : index
    %c0_15 = arith.constant 0 : index
    %24 = vector.load %arg6[%c0_14, %c0_15] : memref<32x32xbf16, #tpu.memory_space<vmem>>, vector<32x32xbf16>
    %cst_16 = arith.constant dense<0.000000e+00> : vector<32x32xf32>
    %25 = tpu.matmul %23, %24, %cst_16 {dimension_numbers = #tpu.dot_dimension_numbers<[1], [0], [0], [1], [0, 0, 1, 1], [], []>} : vector<32x32xbf16>, vector<32x32xbf16>, vector<32x32xf32> -> vector<32x32xf32>
    %c0_17 = arith.constant 0 : index
    %c0_18 = arith.constant 0 : index
    %26 = vector.load %arg7[%c0_17, %c0_18] : memref<1x32xf32, #tpu.memory_space<vmem>>, vector<1x32xf32>
    %27 = vector.broadcast %26 : vector<1x32xf32> to vector<32x32xf32>
    %28 = arith.addf %25, %27 : vector<32x32xf32>
    %cst_19 = arith.constant 0.000000e+00 : f32
    %29 = vector.broadcast %cst_19 : f32 to vector<32x32xf32>
    %30 = arith.cmpf ogt, %28, %29 : vector<32x32xf32>
    %cst_20 = arith.constant 1.000000e-01 : f32
    %31 = vector.broadcast %cst_20 : f32 to vector<32x32xf32>
    %32 = arith.mulf %31, %28 : vector<32x32xf32>
    %33 = arith.select %30, %28, %32 : vector<32x32xi1>, vector<32x32xf32>
    %34 = arith.truncf %33 : vector<32x32xf32> to vector<32x32xbf16>
    %c0_21 = arith.constant 0 : index
    %c0_22 = arith.constant 0 : index
    %35 = vector.load %arg8[%c0_21, %c0_22] : memref<32x16xbf16, #tpu.memory_space<vmem>>, vector<32x16xbf16>
    %cst_23 = arith.constant dense<0.000000e+00> : vector<32x16xf32>
    %36 = tpu.matmul %34, %35, %cst_23 {dimension_numbers = #tpu.dot_dimension_numbers<[1], [0], [0], [1], [0, 0, 1, 1], [], []>} : vector<32x32xbf16>, vector<32x16xbf16>, vector<32x16xf32> -> vector<32x16xf32>
    %c0_24 = arith.constant 0 : index
    %c0_25 = arith.constant 0 : index
    %37 = vector.load %arg9[%c0_24, %c0_25] : memref<1x16xf32, #tpu.memory_space<vmem>>, vector<1x16xf32>
    %38 = vector.broadcast %37 : vector<1x16xf32> to vector<32x16xf32>
    %39 = arith.addf %36, %38 : vector<32x16xf32>
    %c0_26 = arith.constant 0 : index
    %c0_27 = arith.constant 0 : index
    %40 = vector.load %arg10[%c0_26, %c0_27] : memref<32x16xf32, #tpu.memory_space<vmem>>, vector<32x16xf32>
    tpu.vector_store %arg10[%c0_26, %c0_27], %39 {strides = array<i32>} : memref<32x16xf32, #tpu.memory_space<vmem>>, vector<32x16xf32>,
    return
  }
  func.func @transform_0(%arg0: i32) -> (i32, i32) {
    %c0_i32 = arith.constant 0 : i32
    %c0_i32_0 = arith.constant 0 : i32
    return %arg0, %c0_i32 : i32, i32
  }
  func.func @transform_1(%arg0: i32) -> (i32, i32) {
    %c0_i32 = arith.constant 0 : i32
    %c0_i32_0 = arith.constant 0 : i32
    %c0_i32_1 = arith.constant 0 : i32
    return %c0_i32, %c0_i32_0 : i32, i32
  }
  func.func @transform_2(%arg0: i32) -> (i32, i32) {
    %c0_i32 = arith.constant 0 : i32
    %c0_i32_0 = arith.constant 0 : i32
    %c0_i32_1 = arith.constant 0 : i32
    return %c0_i32, %c0_i32_0 : i32, i32
  }
  func.func @transform_3(%arg0: i32) -> (i32, i32) {
    %c0_i32 = arith.constant 0 : i32
    %c0_i32_0 = arith.constant 0 : i32
    %c0_i32_1 = arith.constant 0 : i32
    return %c0_i32, %c0_i32_0 : i32, i32
  }
  func.func @transform_4(%arg0: i32) -> (i32, i32) {
    %c0_i32 = arith.constant 0 : i32
    %c0_i32_0 = arith.constant 0 : i32
    %c0_i32_1 = arith.constant 0 : i32
    return %c0_i32, %c0_i32_0 : i32, i32
  }
  func.func @transform_5(%arg0: i32) -> (i32, i32) {
    %c0_i32 = arith.constant 0 : i32
    %c0_i32_0 = arith.constant 0 : i32
    %c0_i32_1 = arith.constant 0 : i32
    return %c0_i32, %c0_i32_0 : i32, i32
  }
  func.func @transform_6(%arg0: i32) -> (i32, i32) {
    %c0_i32 = arith.constant 0 : i32
    %c0_i32_0 = arith.constant 0 : i32
    %c0_i32_1 = arith.constant 0 : i32
    return %c0_i32, %c0_i32_0 : i32, i32
  }
  func.func @transform_7(%arg0: i32) -> (i32, i32) {
    %c0_i32 = arith.constant 0 : i32
    %c0_i32_0 = arith.constant 0 : i32
    %c0_i32_1 = arith.constant 0 : i32
    return %c0_i32, %c0_i32_0 : i32, i32
  }
  func.func @transform_8(%arg0: i32) -> (i32, i32) {
    %c0_i32 = arith.constant 0 : i32
    %c0_i32_0 = arith.constant 0 : i32
    %c0_i32_1 = arith.constant 0 : i32
    return %c0_i32, %c0_i32_0 : i32, i32
  }
  func.func @transform_9(%arg0: i32) -> (i32, i32) {
    %c0_i32 = arith.constant 0 : i32
    %c0_i32_0 = arith.constant 0 : i32
    return %arg0, %c0_i32 : i32, i32
  }
}

</mosaic_0001>

<llo_original>
// kernel: generator_forward.1
$region0: #{generator_forward.1}
  #allocation0 [shape = 'u32[]', space=smem, size = 0x4, offset = 0x4, fixed_abs, tag = 'smem constant byte address 0x4 - core index']
  #allocation1 [shape = 'u32[144,128]{1,0:T(1,128)}', space=vmem, size = 0x12000, scoped, tag = 'internal scratch']
  %s0 = inlined_call_operand.vmem [shape: f32[128,16], index: 0, kind: input, shape index: {}]
  %s1 = inlined_call_operand.vmem [shape: bf16[16,32], index: 1, kind: input, shape index: {}]
  %s2 = inlined_call_operand.vmem [shape: f32[1,32], index: 2, kind: input, shape index: {}]
  %s3 = inlined_call_operand.vmem [shape: bf16[32,32], index: 3, kind: input, shape index: {}]
  %s4 = inlined_call_operand.vmem [shape: f32[1,32], index: 4, kind: input, shape index: {}]
  %s5 = inlined_call_operand.vmem [shape: bf16[32,32], index: 5, kind: input, shape index: {}]
  %s6 = inlined_call_operand.vmem [shape: f32[1,32], index: 6, kind: input, shape index: {}]
  %s7 = inlined_call_operand.vmem [shape: bf16[32,16], index: 7, kind: input, shape index: {}]
  %s8 = inlined_call_operand.vmem [shape: f32[1,16], index: 8, kind: input, shape index: {}]
  %s9 = inlined_call_operand.vmem [shape: f32[128,16], index: 9, kind: output, shape index: {}]
  %s10 = sld [smem:[#allocation0]]
  $region69: #{generator_forward.1} parent=0
    _
  %s12 = ssub.s32 1, %s10
  %s13 = scalar_select 0, %s12, %s10
  loop: start=0, step=1, limit=6
  $region2: #{generator_forward.1} parent=0 // loop_pre_header
    _
  $region3: #{generator_forward.1} parent=0 // loop_header
    %s15 = sphi 0, %s19
    %p16 = scmp.ge.s32.totalorder %s15, 6
    %s25 = sphi 0, %s27
    %s28 = sphi 0, %s25
    %s29 = sphi 0, %s28
    %s45 = sphi 0, %s29
    %s49 = sphi 0, %s49
    %s51 = sphi 0, %s49
    %s52 = sphi 0, %s51
    %s66 = sphi 0, %s52
    %s70 = sphi 0, %s70
    %s72 = sphi 0, %s70
    %s73 = sphi 0, %s72
    %s87 = sphi 0, %s73
    %s91 = sphi 0, %s91
    %s93 = sphi 0, %s91
    %s94 = sphi 0, %s93
    %s108 = sphi 0, %s94
    %s112 = sphi 0, %s112
    %s114 = sphi 0, %s112
    %s115 = sphi 0, %s114
    %s129 = sphi 0, %s115
    %s133 = sphi 0, %s133
    %s135 = sphi 0, %s133
    %s136 = sphi 0, %s135
    %s150 = sphi 0, %s136
    %s154 = sphi 0, %s154
    %s156 = sphi 0, %s154
    %s157 = sphi 0, %s156
    %s171 = sphi 0, %s157
    %s175 = sphi 0, %s175
    %s177 = sphi 0, %s175
    %s178 = sphi 0, %s177
    %s192 = sphi 0, %s178
    %s196 = sphi 0, %s196
    %s198 = sphi 0, %s196
    %s199 = sphi 0, %s198
    %s213 = sphi 0, %s199
    %s219 = sphi 0, %s221
    %s222 = sphi 0, %s219
    %s223 = sphi 0, %s222
    %s239 = sphi 0, %s223
  $region4: #{generator_forward.1} parent=0 // loop_header_branch
    %18 = sbr.rel (%p16) target = $region8
  $region5: #{generator_forward.1} parent=0 // loop_body
    %s20 = ssub.s32 %s15, 1
    %s21 = ssub.s32 %s15, 2
    %s22 = sadd.s32 %s15, 1
    %s23 = ssub.s32 %s15, %s22
    %p24 = scmp.eq.s32.totalorder %s23, 0
    %s26 = sadd.s32 %s25, 1
    %s27 = scalar_select %p24, %s25, %s26
    %p30 = pneg %p24
    %p31 = scmp.eq.s32.totalorder %s15, 3
    %p32 = por %p30, %p31
    %p33 = scmp.ne.s32.totalorder %s25, %s28
    %p34 = scmp.eq.s32.totalorder %s15, 0
    %p35 = por %p33, %p34
    %p36 = scmp.ne.s32.totalorder %s25, %s28
    %p37 = scmp.eq.s32.totalorder %s20, 3
    %p38 = por %p36, %p37
    %p39 = scmp.ne.s32.totalorder %s28, %s29
    %p40 = scmp.eq.s32.totalorder %s20, 0
    %p41 = por %p39, %p40
    %p42 = scmp.ne.s32.totalorder %s28, %s29
    %p43 = scmp.eq.s32.totalorder %s21, 3
    %p44 = por %p42, %p43
    %p46 = scmp.ne.s32.totalorder %s29, %s45
    %p47 = scmp.eq.s32.totalorder %s21, 0
    %p48 = por %p46, %p47
    %s50 = sadd.s32 %s49, 1
    %p53 = scmp.eq.s32.totalorder %s15, 3
    %p54 = scmp.ne.s32.totalorder %s49, %s51
    %p55 = scmp.eq.s32.totalorder %s15, 0
    %p56 = por %p54, %p55
    %p57 = scmp.ne.s32.totalorder %s49, %s51
    %p58 = scmp.eq.s32.totalorder %s20, 3
    %p59 = por %p57, %p58
    %p60 = scmp.ne.s32.totalorder %s51, %s52
    %p61 = scmp.eq.s32.totalorder %s20, 0
    %p62 = por %p60, %p61
    %p63 = scmp.ne.s32.totalorder %s51, %s52
    %p64 = scmp.eq.s32.totalorder %s21, 3
    %p65 = por %p63, %p64
    %p67 = scmp.ne.s32.totalorder %s52, %s66
    %p68 = scmp.eq.s32.totalorder %s21, 0
    %p69 = por %p67, %p68
    %s71 = sadd.s32 %s70, 1
    %p74 = scmp.eq.s32.totalorder %s15, 3
    %p75 = scmp.ne.s32.totalorder %s70, %s72
    %p76 = scmp.eq.s32.totalorder %s15, 0
    %p77 = por %p75, %p76
    %p78 = scmp.ne.s32.totalorder %s70, %s72
    %p79 = scmp.eq.s32.totalorder %s20, 3
    %p80 = por %p78, %p79
    %p81 = scmp.ne.s32.totalorder %s72, %s73
    %p82 = scmp.eq.s32.totalorder %s20, 0
    %p83 = por %p81, %p82
    %p84 = scmp.ne.s32.totalorder %s72, %s73
    %p85 = scmp.eq.s32.totalorder %s21, 3
    %p86 = por %p84, %p85
    %p88 = scmp.ne.s32.totalorder %s73, %s87
    %p89 = scmp.eq.s32.totalorder %s21, 0
    %p90 = por %p88, %p89
    %s92 = sadd.s32 %s91, 1
    %p95 = scmp.eq.s32.totalorder %s15, 3
    %p96 = scmp.ne.s32.totalorder %s91, %s93
    %p97 = scmp.eq.s32.totalorder %s15, 0
    %p98 = por %p96, %p97
    %p99 = scmp.ne.s32.totalorder %s91, %s93
    %p100 = scmp.eq.s32.totalorder %s20, 3
    %p101 = por %p99, %p100
    %p102 = scmp.ne.s32.totalorder %s93, %s94
    %p103 = scmp.eq.s32.totalorder %s20, 0
    %p104 = por %p102, %p103
    %p105 = scmp.ne.s32.totalorder %s93, %s94
    %p106 = scmp.eq.s32.totalorder %s21, 3
    %p107 = por %p105, %p106
    %p109 = scmp.ne.s32.totalorder %s94, %s108
    %p110 = scmp.eq.s32.totalorder %s21, 0
    %p111 = por %p109, %p110
    %s113 = sadd.s32 %s112, 1
    %p116 = scmp.eq.s32.totalorder %s15, 3
    %p117 = scmp.ne.s32.totalorder %s112, %s114
    %p118 = scmp.eq.s32.totalorder %s15, 0
    %p119 = por %p117, %p118
    %p120 = scmp.ne.s32.totalorder %s112, %s114
    %p121 = scmp.eq.s32.totalorder %s20, 3
    %p122 = por %p120, %p121
    %p123 = scmp.ne.s32.totalorder %s114, %s115
    %p124 = scmp.eq.s32.totalorder %s20, 0
    %p125 = por %p123, %p124
    %p126 = scmp.ne.s32.totalorder %s114, %s115
    %p127 = scmp.eq.s32.totalorder %s21, 3
    %p128 = por %p126, %p127
    %p130 = scmp.ne.s32.totalorder %s115, %s129
    %p131 = scmp.eq.s32.totalorder %s21, 0
    %p132 = por %p130, %p131
    %s134 = sadd.s32 %s133, 1
    %p137 = scmp.eq.s32.totalorder %s15, 3
    %p138 = scmp.ne.s32.totalorder %s133, %s135
    %p139 = scmp.eq.s32.totalorder %s15, 0
    %p140 = por %p138, %p139
    %p141 = scmp.ne.s32.totalorder %s133, %s135
    %p142 = scmp.eq.s32.totalorder %s20, 3
    %p143 = por %p141, %p142
    %p144 = scmp.ne.s32.totalorder %s135, %s136
    %p145 = scmp.eq.s32.totalorder %s20, 0
    %p146 = por %p144, %p145
    %p147 = scmp.ne.s32.totalorder %s135, %s136
    %p148 = scmp.eq.s32.totalorder %s21, 3
    %p149 = por %p147, %p148
    %p151 = scmp.ne.s32.totalorder %s136, %s150
    %p152 = scmp.eq.s32.totalorder %s21, 0
    %p153 = por %p151, %p152
    %s155 = sadd.s32 %s154, 1
    %p158 = scmp.eq.s32.totalorder %s15, 3
    %p159 = scmp.ne.s32.totalorder %s154, %s156
    %p160 = scmp.eq.s32.totalorder %s15, 0
    %p161 = por %p159, %p160
    %p162 = scmp.ne.s32.totalorder %s154, %s156
    %p163 = scmp.eq.s32.totalorder %s20, 3
    %p164 = por %p162, %p163
    %p165 = scmp.ne.s32.totalorder %s156, %s157
    %p166 = scmp.eq.s32.totalorder %s20, 0
    %p167 = por %p165, %p166
    %p168 = scmp.ne.s32.totalorder %s156, %s157
    %p169 = scmp.eq.s32.totalorder %s21, 3
    %p170 = por %p168, %p169
    %p172 = scmp.ne.s32.totalorder %s157, %s171
    %p173 = scmp.eq.s32.totalorder %s21, 0
    %p174 = por %p172, %p173
    %s176 = sadd.s32 %s175, 1
    %p179 = scmp.eq.s32.totalorder %s15, 3
    %p180 = scmp.ne.s32.totalorder %s175, %s177
    %p181 = scmp.eq.s32.totalorder %s15, 0
    %p182 = por %p180, %p181
    %p183 = scmp.ne.s32.totalorder %s175, %s177
    %p184 = scmp.eq.s32.totalorder %s20, 3
    %p185 = por %p183, %p184
    %p186 = scmp.ne.s32.totalorder %s177, %s178
    %p187 = scmp.eq.s32.totalorder %s20, 0
    %p188 = por %p186, %p187
    %p189 = scmp.ne.s32.totalorder %s177, %s178
    %p190 = scmp.eq.s32.totalorder %s21, 3
    %p191 = por %p189, %p190
    %p193 = scmp.ne.s32.totalorder %s178, %s192
    %p194 = scmp.eq.s32.totalorder %s21, 0
    %p195 = por %p193, %p194
    %s197 = sadd.s32 %s196, 1
    %p200 = scmp.eq.s32.totalorder %s15, 3
    %p201 = scmp.ne.s32.totalorder %s196, %s198
    %p202 = scmp.eq.s32.totalorder %s15, 0
    %p203 = por %p201, %p202
    %p204 = scmp.ne.s32.totalorder %s196, %s198
    %p205 = scmp.eq.s32.totalorder %s20, 3
    %p206 = por %p204, %p205
    %p207 = scmp.ne.s32.totalorder %s198, %s199
    %p208 = scmp.eq.s32.totalorder %s20, 0
    %p209 = por %p207, %p208
    %p210 = scmp.ne.s32.totalorder %s198, %s199
    %p211 = scmp.eq.s32.totalorder %s21, 3
    %p212 = por %p210, %p211
    %p214 = scmp.ne.s32.totalorder %s199, %s213
    %p215 = scmp.eq.s32.totalorder %s21, 0
    %p216 = por %p214, %p215
    %s217 = ssub.s32 %s15, %s22
    %p218 = scmp.eq.s32.totalorder %s217, 0
    %s220 = sadd.s32 %s219, 1
    %s221 = scalar_select %p218, %s219, %s220
    %p224 = pneg %p218
    %p225 = scmp.eq.s32.totalorder %s15, 3
    %p226 = por %p224, %p225
    %p227 = scmp.ne.s32.totalorder %s219, %s222
    %p228 = scmp.eq.s32.totalorder %s15, 0
    %p229 = por %p227, %p228
    %p230 = scmp.ne.s32.totalorder %s219, %s222
    %p231 = scmp.eq.s32.totalorder %s20, 3
    %p232 = por %p230, %p231
    %p233 = scmp.ne.s32.totalorder %s222, %s223
    %p234 = scmp.eq.s32.totalorder %s20, 0
    %p235 = por %p233, %p234
    %p236 = scmp.ne.s32.totalorder %s222, %s223
    %p237 = scmp.eq.s32.totalorder %s21, 3
    %p238 = por %p236, %p237
    %p240 = scmp.ne.s32.totalorder %s223, %s239
    %p241 = scmp.eq.s32.totalorder %s21, 0
    %p242 = por %p240, %p241
    %p243 = scmp.le.s32.totalorder 1, %s15
    %p244 = scmp.lt.s32.totalorder %s15, 5
    %p245 = pnand %p243, %p244
    %p246 = pneg %p245
    // Predicated region
    $region9: #{generator_forward.1} parent=5 // pred_check
      _
    $region10: #{generator_forward.1} parent=5 // pred_check_branch
      %248 = sbr.rel (%p245) target = $region12
    $region11: #{generator_forward.1} parent=5 // pred_region
      %s249 = ssub.s32 %s15, 1
      // Predicated region
      $region13: #{generator_forward.1} parent=11 // pred_check
        %p250 = pneg %p62
      $region14: #{generator_forward.1} parent=11 // pred_check_branch
        %252 = sbr.rel (%p250) target = $region16
      $region15: #{generator_forward.1} parent=11 // pred_region
        _
      $region16: #{generator_forward.1} parent=11 // pred_fallthru
        _
      // Predicated region
      $region17: #{generator_forward.1} parent=11 // pred_check
        %p253 = pneg %p83
      $region18: #{generator_forward.1} parent=11 // pred_check_branch
        %255 = sbr.rel (%p253) target = $region20
      $region19: #{generator_forward.1} parent=11 // pred_region
        _
      $region20: #{generator_forward.1} parent=11 // pred_fallthru
        _
      // Predicated region
      $region21: #{generator_forward.1} parent=11 // pred_check
        %p256 = pneg %p104
      $region22: #{generator_forward.1} parent=11 // pred_check_branch
        %258 = sbr.rel (%p256) target = $region24
      $region23: #{generator_forward.1} parent=11 // pred_region
        _
      $region24: #{generator_forward.1} parent=11 // pred_fallthru
        _
      // Predicated region
      $region25: #{generator_forward.1} parent=11 // pred_check
        %p259 = pneg %p125
      $region26: #{generator_forward.1} parent=11 // pred_check_branch
        %261 = sbr.rel (%p259) target = $region28
      $region27: #{generator_forward.1} parent=11 // pred_region
        _
      $region28: #{generator_forward.1} parent=11 // pred_fallthru
        _
      // Predicated region
      $region29: #{generator_forward.1} parent=11 // pred_check
        %p262 = pneg %p146
      $region30: #{generator_forward.1} parent=11 // pred_check_branch
        %264 = sbr.rel (%p262) target = $region32
      $region31: #{generator_forward.1} parent=11 // pred_region
        _
      $region32: #{generator_forward.1} parent=11 // pred_fallthru
        _
      // Predicated region
      $region33: #{generator_forward.1} parent=11 // pred_check
        %p265 = pneg %p167
      $region34: #{generator_forward.1} parent=11 // pred_check_branch
        %267 = sbr.rel (%p265) target = $region36
      $region35: #{generator_forward.1} parent=11 // pred_region
        _
      $region36: #{generator_forward.1} parent=11 // pred_fallthru
        _
      // Predicated region
      $region37: #{generator_forward.1} parent=11 // pred_check
        %p268 = pneg %p188
      $region38: #{generator_forward.1} parent=11 // pred_check_branch
        %270 = sbr.rel (%p268) target = $region40
      $region39: #{generator_forward.1} parent=11 // pred_region
        _
      $region40: #{generator_forward.1} parent=11 // pred_fallthru
        _
      // Predicated region
      $region41: #{generator_forward.1} parent=11 // pred_check
        %p271 = pneg %p209
      $region42: #{generator_forward.1} parent=11 // pred_check_branch
        %273 = sbr.rel (%p271) target = $region44
      $region43: #{generator_forward.1} parent=11 // pred_region
        _
      $region44: #{generator_forward.1} parent=11 // pred_fallthru
        _
    $region12: #{generator_forward.1} parent=5 // pred_fallthru
      _
    %p274 = scmp.lt.s32.totalorder %s15, 4
    // Predicated region
    $region45: #{generator_forward.1} parent=5 // pred_check
      %p275 = pneg %p274
    $region46: #{generator_forward.1} parent=5 // pred_check_branch
      %277 = sbr.rel (%p275) target = $region48
    $region47: #{generator_forward.1} parent=5 // pred_region
      // Predicated region
      $region49: #{generator_forward.1} parent=47 // pred_check
        %p278 = pneg %p35
      $region50: #{generator_forward.1} parent=47 // pred_check_branch
        %280 = sbr.rel (%p278) target = $region52
      $region51: #{generator_forward.1} parent=47 // pred_region
        %s281 = smul.u32 4, %s15
        %p282 = scmp.lt.s32.totalorder %s281, 15
        %s283 = scalar_select %p282, %s281, 15
        %s284 = smul.addr %s283, 8
        %s285 = scalar_lea.vmem %s0, %s284
        %s286 = smul.u32 4, %s15
      $region52: #{generator_forward.1} parent=47 // pred_fallthru
        _
    $region48: #{generator_forward.1} parent=5 // pred_fallthru
      _
    %p287 = scmp.le.s32.totalorder 1, %s15
    %p288 = scmp.lt.s32.totalorder %s15, 5
    %p289 = pnand %p287, %p288
    %p290 = pneg %p289
    // Predicated region
    $region53: #{generator_forward.1} parent=5 // pred_check
      _
    $region54: #{generator_forward.1} parent=5 // pred_check_branch
      %292 = sbr.rel (%p289) target = $region56
    $region55: #{generator_forward.1} parent=5 // pred_region
      %s293 = ssub.s32 %s15, 1
      %s294 = smul.u32 4, %s20
      %p295 = scmp.lt.s32.totalorder %s294, 15
      %s296 = scalar_select %p295, %s294, 15
      %s297 = smul.addr %s296, 8
      %s298 = scalar_lea.vmem %s0, %s297
      %p299 = pneg %p41
      %p300 = pneg %p38
      %p301 = pneg %p62
      %p302 = pneg %p59
      %p303 = pneg %p83
      %p304 = pneg %p80
      %p305 = pneg %p104
      %p306 = pneg %p101
      %p307 = pneg %p125
      %p308 = pneg %p122
      %p309 = pneg %p146
      %p310 = pneg %p143
      %p311 = pneg %p167
      %p312 = pneg %p164
      %p313 = pneg %p188
      %p314 = pneg %p185
      %p315 = pneg %p209
      %p316 = pneg %p206
      %p317 = pneg %p235
      %p318 = pneg %p232
      %s319 = smul.u32 4, %s20
      %p320 = scmp.lt.s32.totalorder %s319, 15
      %s321 = scalar_select %p320, %s319, 15
      %s322 = smul.addr %s321, 8
      %s323 = scalar_lea.vmem %s9, %s322
      %s324 = smul.u32 4, %s20
      %p325 = scmp.lt.s32.totalorder %s324, 15
      %s326 = scalar_select %p325, %s324, 15
      %s327 = smul.addr %s326, 8
      %s328 = scalar_lea.vmem %s0, %s327
      %s329 = smul.u32 4, %s20
      %s330 = smul.u32 4, %s20
      %p331 = scmp.lt.s32.totalorder %s330, 15
      %s332 = scalar_select %p331, %s330, 15
      %s333 = smul.addr %s332, 8
      %s334 = scalar_lea.vmem %s9, %s333
      %s335 = smul.u32 4, %s20
      %v337 = vld [vmem:[%s328] sm:$0xff]
      %v338 = vld [vmem:[%s328 + $0x8] sm:$0xff]
      %v339 = vld [vmem:[%s328 + $0x10] sm:$0xff]
      %v340 = vld [vmem:[%s328 + $0x18] sm:$0xff]
      %v341 = vpack.c.bf16 %v338, %v337
      %v342 = vpack.c.bf16 %v340, %v339
      %v343 = vld [vmem:[%s1] sm:$0xf]
      %v344 = vld [vmem:[%s1 + $0x4] sm:$0xf]
      %v345 = vld [vmem:[%s2] sm:$0x1]
      %v347 = vlaneseq
      %v348 = vshrl.u32 %v347, 7
      %v349 = vsub.s32 0, %v348
      %v350 = vrot.slane %v345, %v349
      %v354 = vunpack.c.l.b16 %v343
      %v355 = vunpack.c.l.b16 %v344
      %v356 = vpack.c.b16 %v355, %v354
      %vm358 = vcmask 130048
      %v360 = vsel %vm358, %v341, 0
      %v363 = vsel %vm358, %v342, 0
      %365 = vmatprep.subr.bf16.mxu0 0
      %366 = vmatpush1.bf16.msra.mxu0 %v356
      %367 = vmatprep.subr.bf16.mxu0 0
      %368 = vmatpush1.bf16.msra.mxu0 0
      %369 = vmatprep.subr.bf16.mxu0 0
      %370 = vmatpush1.bf16.msra.mxu0 0
      %371 = vmatprep.subr.bf16.mxu0 0
      %372 = vmatpush1.bf16.msra.mxu0 0
      %373 = vmatprep.subr.bf16.mxu0 0
      %374 = vmatpush1.bf16.msra.mxu0 0
      %375 = vmatprep.subr.bf16.mxu0 0
      %376 = vmatpush1.bf16.msra.mxu0 0
      %377 = vmatprep.subr.bf16.mxu0 0
      %378 = vmatpush1.bf16.msra.mxu0 0
      %379 = vmatprep.subr.bf16.mxu0 0
      %380 = vmatpush1.bf16.msra.mxu0 0
      %381 = vmatprep.subr.bf16.mxu0 0
      %382 = vmatpush1.bf16.msra.mxu0 0
      %383 = vmatprep.subr.bf16.mxu0 0
      %384 = vmatpush1.bf16.msra.mxu0 0
      %385 = vmatprep.subr.bf16.mxu0 0
      %386 = vmatpush1.bf16.msra.mxu0 0
      %387 = vmatprep.subr.bf16.mxu0 0
      %388 = vmatpush1.bf16.msra.mxu0 0
      %389 = vmatprep.subr.bf16.mxu0 0
      %390 = vmatpush1.bf16.msra.mxu0 0
      %391 = vmatprep.subr.bf16.mxu0 0
      %392 = vmatpush1.bf16.msra.mxu0 0
      %393 = vmatprep.subr.bf16.mxu0 0
      %394 = vmatpush1.bf16.msra.mxu0 0
      %395 = vmatprep.subr.bf16.mxu0 0
      %396 = vmatpush1.bf16.msra.mxu0 0
      %397 = vmatprep.mubr.bf16.mxu0 0
      %398 = vmatmul.mubr.bf16.gmra.mrb[0].mxu0 %v360
      %v399 = vpop.f32.mrb[0].mxu0
      %v400 = vadd.f32 %v350, %v399
      %v401 = vpop.f32.mrb[0].mxu0
      %v402 = vpop.f32.mrb[0].mxu0
      %v403 = vadd.f32 %v350, %v402
      %v404 = vpop.f32.mrb[0].mxu0
      %405 = vmatprep.mubr.bf16.mxu0 0
      %406 = vmatmul.mubr.bf16.gmra.mrb[0].mxu0 %v363
      %v407 = vpop.f32.mrb[0].mxu0
      %v408 = vadd.f32 %v350, %v407
      %v409 = vpop.f32.mrb[0].mxu0
      %v410 = vpop.f32.mrb[0].mxu0
      %v411 = vadd.f32 %v350, %v410
      %v412 = vpop.f32.mrb[0].mxu0
      %413 = vdwg.mxu0
      %vm414 = vcmp.gt.f32.partialorder %v400, 0.0
      %vm415 = vcmp.gt.f32.partialorder %v403, 0.0
      %vm416 = vcmp.gt.f32.partialorder %v408, 0.0
      %vm417 = vcmp.gt.f32.partialorder %v411, 0.0
      %v418 = vmul.f32 %v400, 0.1
      %v419 = vmul.f32 %v403, 0.1
      %v420 = vmul.f32 %v408, 0.1
      %v421 = vmul.f32 %v411, 0.1
      %v422 = vsel %vm414, %v400, %v418
      %v423 = vsel %vm415, %v403, %v419
      %v424 = vsel %vm416, %v408, %v420
      %v425 = vsel %vm417, %v411, %v421
      %v426 = vpack.c.bf16 %v423, %v422
      %v427 = vpack.c.bf16 %v425, %v424
      %v428 = vld [vmem:[%s3] sm:$0xf]
      %v429 = vld [vmem:[%s3 + $0x4] sm:$0xf]
      %v430 = vld [vmem:[%s3 + $0x8] sm:$0xf]
      %v431 = vld [vmem:[%s3 + $0xc] sm:$0xf]
      %v432 = vld [vmem:[%s4] sm:$0x1]
      %v434 = vlaneseq
      %v435 = vshrl.u32 %v434, 7
      %v436 = vsub.s32 0, %v435
      %v437 = vrot.slane %v432, %v436
      %v443 = vunpack.c.l.b16 %v428
      %v444 = vunpack.c.l.b16 %v429
      %v445 = vunpack.c.l.b16 %v430
      %v446 = vunpack.c.l.b16 %v431
      %v447 = vpack.c.b16 %v444, %v443
      %v448 = vpack.c.b16 %v446, %v445
      %vm451 = vcmask 261120
      %v453 = vsel %vm451, %v426, 0
      %v456 = vsel %vm451, %v427, 0
      %458 = vmatprep.subr.bf16.mxu0 0
      %459 = vmatpush1.bf16.msra.mxu0 %v447
      %460 = vmatprep.subr.bf16.mxu0 0
      %461 = vmatpush1.bf16.msra.mxu0 %v448
      %462 = vmatprep.subr.bf16.mxu0 0
      %463 = vmatpush1.bf16.msra.mxu0 0
      %464 = vmatprep.subr.bf16.mxu0 0
      %465 = vmatpush1.bf16.msra.mxu0 0
      %466 = vmatprep.subr.bf16.mxu0 0
      %467 = vmatpush1.bf16.msra.mxu0 0
      %468 = vmatprep.subr.bf16.mxu0 0
      %469 = vmatpush1.bf16.msra.mxu0 0
      %470 = vmatprep.subr.bf16.mxu0 0
      %471 = vmatpush1.bf16.msra.mxu0 0
      %472 = vmatprep.subr.bf16.mxu0 0
      %473 = vmatpush1.bf16.msra.mxu0 0
      %474 = vmatprep.subr.bf16.mxu0 0
      %475 = vmatpush1.bf16.msra.mxu0 0
      %476 = vmatprep.subr.bf16.mxu0 0
      %477 = vmatpush1.bf16.msra.mxu0 0
      %478 = vmatprep.subr.bf16.mxu0 0
      %479 = vmatpush1.bf16.msra.mxu0 0
      %480 = vmatprep.subr.bf16.mxu0 0
      %481 = vmatpush1.bf16.msra.mxu0 0
      %482 = vmatprep.subr.bf16.mxu0 0
      %483 = vmatpush1.bf16.msra.mxu0 0
      %484 = vmatprep.subr.bf16.mxu0 0
      %485 = vmatpush1.bf16.msra.mxu0 0
      %486 = vmatprep.subr.bf16.mxu0 0
      %487 = vmatpush1.bf16.msra.mxu0 0
      %488 = vmatprep.subr.bf16.mxu0 0
      %489 = vmatpush1.bf16.msra.mxu0 0
      %490 = vmatprep.mubr.bf16.mxu0 0
      %491 = vmatmul.mubr.bf16.gmra.mrb[0].mxu0 %v453
      %v492 = vpop.f32.mrb[0].mxu0
      %v493 = vadd.f32 %v437, %v492
      %v494 = vpop.f32.mrb[0].mxu0
      %v495 = vpop.f32.mrb[0].mxu0
      %v496 = vadd.f32 %v437, %v495
      %v497 = vpop.f32.mrb[0].mxu0
      %498 = vmatprep.mubr.bf16.mxu0 0
      %499 = vmatmul.mubr.bf16.gmra.mrb[0].mxu0 %v456
      %v500 = vpop.f32.mrb[0].mxu0
      %v501 = vadd.f32 %v437, %v500
      %v502 = vpop.f32.mrb[0].mxu0
      %v503 = vpop.f32.mrb[0].mxu0
      %v504 = vadd.f32 %v437, %v503
      %v505 = vpop.f32.mrb[0].mxu0
      %506 = vdwg.mxu0
      %vm507 = vcmp.gt.f32.partialorder %v493, 0.0
      %vm508 = vcmp.gt.f32.partialorder %v496, 0.0
      %vm509 = vcmp.gt.f32.partialorder %v501, 0.0
      %vm510 = vcmp.gt.f32.partialorder %v504, 0.0
      %v511 = vmul.f32 %v493, 0.1
      %v512 = vmul.f32 %v496, 0.1
      %v513 = vmul.f32 %v501, 0.1
      %v514 = vmul.f32 %v504, 0.1
      %v515 = vsel %vm507, %v493, %v511
      %v516 = vsel %vm508, %v496, %v512
      %v517 = vsel %vm509, %v501, %v513
      %v518 = vsel %vm510, %v504, %v514
      %v519 = vpack.c.bf16 %v516, %v515
      %v520 = vpack.c.bf16 %v518, %v517
      %v521 = vld [vmem:[%s5] sm:$0xf]
      %v522 = vld [vmem:[%s5 + $0x4] sm:$0xf]
      %v523 = vld [vmem:[%s5 + $0x8] sm:$0xf]
      %v524 = vld [vmem:[%s5 + $0xc] sm:$0xf]
      %v525 = vld [vmem:[%s6] sm:$0x1]
      %v527 = vlaneseq
      %v528 = vshrl.u32 %v527, 7
      %v529 = vsub.s32 0, %v528
      %v530 = vrot.slane %v525, %v529
      %v536 = vunpack.c.l.b16 %v521
      %v537 = vunpack.c.l.b16 %v522
      %v538 = vunpack.c.l.b16 %v523
      %v539 = vunpack.c.l.b16 %v524
      %v540 = vpack.c.b16 %v537, %v536
      %v541 = vpack.c.b16 %v539, %v538
      %v545 = vsel %vm451, %v519, 0
      %v548 = vsel %vm451, %v520, 0
      %550 = vmatprep.subr.bf16.mxu0 0
      %551 = vmatpush1.bf16.msra.mxu0 %v540
      %552 = vmatprep.subr.bf16.mxu0 0
      %553 = vmatpush1.bf16.msra.mxu0 %v541
      %554 = vmatprep.subr.bf16.mxu0 0
      %555 = vmatpush1.bf16.msra.mxu0 0
      %556 = vmatprep.subr.bf16.mxu0 0
      %557 = vmatpush1.bf16.msra.mxu0 0
      %558 = vmatprep.subr.bf16.mxu0 0
      %559 = vmatpush1.bf16.msra.mxu0 0
      %560 = vmatprep.subr.bf16.mxu0 0
      %561 = vmatpush1.bf16.msra.mxu0 0
      %562 = vmatprep.subr.bf16.mxu0 0
      %563 = vmatpush1.bf16.msra.mxu0 0
      %564 = vmatprep.subr.bf16.mxu0 0
      %565 = vmatpush1.bf16.msra.mxu0 0
      %566 = vmatprep.subr.bf16.mxu0 0
      %567 = vmatpush1.bf16.msra.mxu0 0
      %568 = vmatprep.subr.bf16.mxu0 0
      %569 = vmatpush1.bf16.msra.mxu0 0
      %570 = vmatprep.subr.bf16.mxu0 0
      %571 = vmatpush1.bf16.msra.mxu0 0
      %572 = vmatprep.subr.bf16.mxu0 0
      %573 = vmatpush1.bf16.msra.mxu0 0
      %574 = vmatprep.subr.bf16.mxu0 0
      %575 = vmatpush1.bf16.msra.mxu0 0
      %576 = vmatprep.subr.bf16.mxu0 0
      %577 = vmatpush1.bf16.msra.mxu0 0
      %578 = vmatprep.subr.bf16.mxu0 0
      %579 = vmatpush1.bf16.msra.mxu0 0
      %580 = vmatprep.subr.bf16.mxu0 0
      %581 = vmatpush1.bf16.msra.mxu0 0
      %582 = vmatprep.mubr.bf16.mxu0 0
      %583 = vmatmul.mubr.bf16.gmra.mrb[0].mxu0 %v545
      %v584 = vpop.f32.mrb[0].mxu0
      %v585 = vadd.f32 %v530, %v584
      %v586 = vpop.f32.mrb[0].mxu0
      %v587 = vpop.f32.mrb[0].mxu0
      %v588 = vadd.f32 %v530, %v587
      %v589 = vpop.f32.mrb[0].mxu0
      %590 = vmatprep.mubr.bf16.mxu0 0
      %591 = vmatmul.mubr.bf16.gmra.mrb[0].mxu0 %v548
      %v592 = vpop.f32.mrb[0].mxu0
      %v593 = vadd.f32 %v530, %v592
      %v594 = vpop.f32.mrb[0].mxu0
      %v595 = vpop.f32.mrb[0].mxu0
      %v596 = vadd.f32 %v530, %v595
      %v597 = vpop.f32.mrb[0].mxu0
      %598 = vdwg.mxu0
      %vm599 = vcmp.gt.f32.partialorder %v585, 0.0
      %vm600 = vcmp.gt.f32.partialorder %v588, 0.0
      %vm601 = vcmp.gt.f32.partialorder %v593, 0.0
      %vm602 = vcmp.gt.f32.partialorder %v596, 0.0
      %v603 = vmul.f32 %v585, 0.1
      %v604 = vmul.f32 %v588, 0.1
      %v605 = vmul.f32 %v593, 0.1
      %v606 = vmul.f32 %v596, 0.1
      %v607 = vsel %vm599, %v585, %v603
      %v608 = vsel %vm600, %v588, %v604
      %v609 = vsel %vm601, %v593, %v605
      %v610 = vsel %vm602, %v596, %v606
      %v611 = vpack.c.bf16 %v608, %v607
      %v612 = vpack.c.bf16 %v610, %v609
      %v613 = vld [vmem:[%s7] sm:$0xf]
      %v614 = vld [vmem:[%s7 + $0x4] sm:$0xf]
      %v615 = vld [vmem:[%s7 + $0x8] sm:$0xf]
      %v616 = vld [vmem:[%s7 + $0xc] sm:$0xf]
      %v617 = vld [vmem:[%s8] sm:$0x1]
      %v619 = vlaneseq
      %v620 = vshrl.u32 %v619, 7
      %v621 = vsub.s32 0, %v620
      %v622 = vrot.slane %v617, %v621
      %v628 = vunpack.c.l.b16 %v613
      %v629 = vunpack.c.l.b16 %v614
      %v630 = vunpack.c.l.b16 %v615
      %v631 = vunpack.c.l.b16 %v616
      %v632 = vpack.c.b16 %v629, %v628
      %v633 = vpack.c.b16 %v631, %v630
      %v637 = vsel %vm451, %v611, 0
      %v640 = vsel %vm451, %v612, 0
      %642 = vmatprep.subr.bf16.mxu0 0
      %643 = vmatpush1.bf16.msra.mxu0 %v632
      %644 = vmatprep.subr.bf16.mxu0 0
      %645 = vmatpush1.bf16.msra.mxu0 %v633
      %646 = vmatprep.subr.bf16.mxu0 0
      %647 = vmatpush1.bf16.msra.mxu0 0
      %648 = vmatprep.subr.bf16.mxu0 0
      %649 = vmatpush1.bf16.msra.mxu0 0
      %650 = vmatprep.subr.bf16.mxu0 0
      %651 = vmatpush1.bf16.msra.mxu0 0
      %652 = vmatprep.subr.bf16.mxu0 0
      %653 = vmatpush1.bf16.msra.mxu0 0
      %654 = vmatprep.subr.bf16.mxu0 0
      %655 = vmatpush1.bf16.msra.mxu0 0
      %656 = vmatprep.subr.bf16.mxu0 0
      %657 = vmatpush1.bf16.msra.mxu0 0
      %658 = vmatprep.subr.bf16.mxu0 0
      %659 = vmatpush1.bf16.msra.mxu0 0
      %660 = vmatprep.subr.bf16.mxu0 0
      %661 = vmatpush1.bf16.msra.mxu0 0
      %662 = vmatprep.subr.bf16.mxu0 0
      %663 = vmatpush1.bf16.msra.mxu0 0
      %664 = vmatprep.subr.bf16.mxu0 0
      %665 = vmatpush1.bf16.msra.mxu0 0
      %666 = vmatprep.subr.bf16.mxu0 0
      %667 = vmatpush1.bf16.msra.mxu0 0
      %668 = vmatprep.subr.bf16.mxu0 0
      %669 = vmatpush1.bf16.msra.mxu0 0
      %670 = vmatprep.subr.bf16.mxu0 0
      %671 = vmatpush1.bf16.msra.mxu0 0
      %672 = vmatprep.subr.bf16.mxu0 0
      %673 = vmatpush1.bf16.msra.mxu0 0
      %674 = vmatprep.mubr.bf16.mxu0 0
      %675 = vmatmul.mubr.bf16.gmra.mrb[0].mxu0 %v637
      %v676 = vpop.f32.mrb[0].mxu0
      %v677 = vadd.f32 %v622, %v676
      %v678 = vpop.f32.mrb[0].mxu0
      %v679 = vpop.f32.mrb[0].mxu0
      %v680 = vadd.f32 %v622, %v679
      %v681 = vpop.f32.mrb[0].mxu0
      %682 = vmatprep.mubr.bf16.mxu0 0
      %683 = vmatmul.mubr.bf16.gmra.mrb[0].mxu0 %v640
      %v684 = vpop.f32.mrb[0].mxu0
      %v685 = vadd.f32 %v622, %v684
      %v686 = vpop.f32.mrb[0].mxu0
      %v687 = vpop.f32.mrb[0].mxu0
      %v688 = vadd.f32 %v622, %v687
      %v689 = vpop.f32.mrb[0].mxu0
      %690 = vdwg.mxu0
      %691 = vst.msk [vmem:[%s334] sm:$0xff] %vm358, %v677
      %692 = vst.msk [vmem:[%s334 + $0x8] sm:$0xff] %vm358, %v680
      %693 = vst.msk [vmem:[%s334 + $0x10] sm:$0xff] %vm358, %v685
      %694 = vst.msk [vmem:[%s334 + $0x18] sm:$0xff] %vm358, %v688
      %s695 = smul.u32 4, %s20
      %p696 = scmp.lt.s32.totalorder %s695, 15
      %s697 = scalar_select %p696, %s695, 15
      %s698 = smul.addr %s697, 8
      %s699 = scalar_lea.vmem %s9, %s698
      // Predicated region
      $region57: #{generator_forward.1} parent=55 // pred_check
        %p700 = pneg %p232
      $region58: #{generator_forward.1} parent=55 // pred_check_branch
        %702 = sbr.rel (%p700) target = $region60
      $region59: #{generator_forward.1} parent=55 // pred_region
        %s703 = smul.u32 4, %s20
      $region60: #{generator_forward.1} parent=55 // pred_fallthru
        _
    $region56: #{generator_forward.1} parent=5 // pred_fallthru
      _
    %p704 = scmp.le.s32.totalorder 2, %s15
    // Predicated region
    $region61: #{generator_forward.1} parent=5 // pred_check
      %p705 = pneg %p704
    $region62: #{generator_forward.1} parent=5 // pred_check_branch
      %707 = sbr.rel (%p705) target = $region64
    $region63: #{generator_forward.1} parent=5 // pred_region
      %s708 = ssub.s32 %s15, 2
      // Predicated region
      $region65: #{generator_forward.1} parent=63 // pred_check
        %p709 = pneg %p238
      $region66: #{generator_forward.1} parent=63 // pred_check_branch
        %711 = sbr.rel (%p709) target = $region68
      $region67: #{generator_forward.1} parent=63 // pred_region
        %s712 = smul.u32 4, %s21
        %p713 = scmp.lt.s32.totalorder %s712, 15
        %s714 = scalar_select %p713, %s712, 15
        %s715 = smul.addr %s714, 8
        %s716 = scalar_lea.vmem %s9, %s715
      $region68: #{generator_forward.1} parent=63 // pred_fallthru
        _
    $region64: #{generator_forward.1} parent=5 // pred_fallthru
      _
  $region6: #{generator_forward.1} parent=0 // loop_footer
    %s19 = sadd.s32 1, %s15
  $region7: #{generator_forward.1} parent=0 // loop_footer_branch
    %14 = sbr.rel target = $region3
  $region8: #{generator_forward.1} parent=0 // loop_exit
    _

</llo_original>
